<compile_context>
chip_gen: v7x
topology: tpu7x:2x2x1
jax: 0.10.0
libtpu: 0.0.40
codegen_flags: <defaults>
</compile_context>

<pallas_src>
import functools
import math

import jax
import jax.numpy as jnp
from jax.experimental import pallas as pl
from jax.experimental.pallas import tpu as pltpu


def timestep_embedder_kernel(t_ref, w1_ref, b1_ref, w2_ref, b2_ref, o_ref, *,
                             half, max_period, matmul_dtype):
    # Frequencies generated in-kernel: one int iota + one EUP exp pass over a
    # single (1, half) row -- cheaper than an extra operand + DMA descriptor.
    k = jax.lax.broadcasted_iota(jnp.int32, (1, half), 1).astype(jnp.float32)
    freqs = jnp.exp(k * (-math.log(max_period) / half))          # (1, half) f32

    t = t_ref[...]                                               # (TB, 1) f32
    args = t * freqs                                             # (TB, half)

    # cos | sin written into adjacent 128-lane tiles of one buffer: the concat
    # sits on a lane-tile boundary (half == 128), so Linear1 becomes a single
    # K = 2*half matmul that natively fills the 256-deep MXU on v6e/v7x.
    emb = jnp.concatenate([jnp.cos(args), jnp.sin(args)], axis=-1)

    h = jnp.dot(emb.astype(matmul_dtype), w1_ref[...],
                preferred_element_type=jnp.float32) + b1_ref[...]
    h = h * jax.nn.sigmoid(h)            # SiLU in f32 (v5e EUP has no bf16)

    out = jnp.dot(h.astype(matmul_dtype), w2_ref[...],
                  preferred_element_type=jnp.float32) + b2_ref[...]
    o_ref[...] = out.astype(o_ref.dtype)


def prepare_params(params, matmul_dtype=jnp.bfloat16):
    """Cast / reshape parameters ONCE (call at model init, not per forward).

    params = (w1, b1, w2, b2) with w* stored as (in_features, out_features).
    Returns kernel-ready arrays: w* in `matmul_dtype`, biases as (1, H) f32.
    """
    w1, b1, w2, b2 = params
    return (jnp.asarray(w1, matmul_dtype),
            jnp.asarray(b1, jnp.float32).reshape(1, -1),
            jnp.asarray(w2, matmul_dtype),
            jnp.asarray(b2, jnp.float32).reshape(1, -1))


def _choose_block_n(n, hidden, half, weight_itemsize, vmem_limit_bytes):
    """Largest row tile that fits the VMEM budget, keeping >=4 grid steps."""
    # Per-row VMEM while a tile is in flight: double-buffered out + t blocks
    # plus f32 intermediates (args/cos/sin/emb ~ 5*half, h/silu/out ~ 4*H).
    per_row = 2 * hidden * 4 + 2 * 4 + (5 * half + 4 * hidden) * 4
    # Resident weights/biases; the pipeline allocates 2 buffers even for
    # constant index_maps, hence the explicit factor 2.
    weight_bytes = 2 * ((2 * half * hidden + hidden * hidden) * weight_itemsize
                        + 2 * hidden * 4)
    budget = int(vmem_limit_bytes * 0.7) - weight_bytes
    cap = max(8, min(4096, (max(budget, 0) // per_row) // 8 * 8))
    # Keep >= 4 grid steps when N allows it so the "parallel" batch axis can
    # be sharded across v7x's 2 TensorCores and per-step overhead amortizes.
    target = max(8, ((pl.cdiv(n, 4) + 7) // 8) * 8)
    return int(min(cap, target))


def timestep_embedder_forward(t, prepared_params, *, freq_dim=256,
                              max_period=10000.0, block_n=None,
                              out_dtype=jnp.float32,
                              vmem_limit_bytes=48 * 1024 * 1024):
    """t: (N,) scalar timesteps; prepared_params from prepare_params()."""
    w1, b1, w2, b2 = prepared_params
    hidden = w1.shape[1]
    assert freq_dim % 2 == 0, "odd freq_dim not supported"
    # TODO(synk): PyTorch zero-pads one column when freq_dim is odd; the
    # module default (256) is even so that branch is not implemented.
    half = freq_dim // 2
    assert w1.shape == (freq_dim, hidden) and w2.shape == (hidden, hidden)

    n = t.shape[0]
    if block_n is None:
        block_n = _choose_block_n(n, hidden, half, w1.dtype.itemsize,
                                  vmem_limit_bytes)
    block_n = max(8, (block_n // 8) * 8)

    n_pad = pl.cdiv(max(n, 1), block_n) * block_n
    t2 = jnp.asarray(t, jnp.float32).reshape(-1, 1)
    if n_pad != n:
        t2 = jnp.pad(t2, ((0, n_pad - n), (0, 0)))

    kernel = functools.partial(timestep_embedder_kernel, half=half,
                               max_period=float(max_period),
                               matmul_dtype=w1.dtype)
    resident = lambda shape: pl.BlockSpec(shape, lambda i: (0, 0))

    out = pl.pallas_call(
        kernel,
        out_shape=jax.ShapeDtypeStruct((n_pad, hidden), out_dtype),
        grid_spec=pltpu.PrefetchScalarGridSpec(
            num_scalar_prefetch=0,
            grid=(n_pad // block_n,),
            in_specs=[
                pl.BlockSpec((block_n, 1), lambda i: (i, 0)),   # t rows (tiled)
                resident((freq_dim, hidden)),                   # W1 (fused)
                resident((1, hidden)),                          # b1
                resident((hidden, hidden)),                     # W2
                resident((1, hidden)),                          # b2
            ],
            out_specs=pl.BlockSpec((block_n, hidden), lambda i: (i, 0)),
        ),
        compiler_params=pltpu.CompilerParams(
            dimension_semantics=("parallel",),
            # 48 MiB default leaves headroom on v7x's 64 MiB VMEM; raise to
            # 64-100 MiB on v5e/v6e (128 MiB) if larger tiles are wanted.
            vmem_limit_bytes=vmem_limit_bytes,
        ),
    )(t2, w1, b1, w2, b2)
    return out[:n] if n_pad != n else out


def timestep_embedder_reference(t, params, freq_dim=256, max_period=10000.0):
    """Pure-JAX reference mirroring the PyTorch module (f32 everywhere)."""
    w1, b1, w2, b2 = params
    half = freq_dim // 2
    freqs = jnp.exp(-math.log(max_period) *
                    jnp.arange(half, dtype=jnp.float32) / half)
    args = t.astype(jnp.float32)[:, None] * freqs[None]
    emb = jnp.concatenate([jnp.cos(args), jnp.sin(args)], axis=-1)
    h = jax.nn.silu(emb @ w1 + b1)
    return h @ w2 + b2


def init_params(key, freq_dim, hidden):
    """Deterministic synthetic parameters (Linear weights stored as (in, out))."""
    k1, k2, k3, k4 = jax.random.split(key, 4)
    s1 = 1.0 / math.sqrt(freq_dim)
    s2 = 1.0 / math.sqrt(hidden)
    w1 = jax.random.uniform(k1, (freq_dim, hidden), jnp.float32, -s1, s1)
    b1 = jax.random.uniform(k2, (hidden,), jnp.float32, -s1, s1)
    w2 = jax.random.uniform(k3, (hidden, hidden), jnp.float32, -s2, s2)
    b2 = jax.random.uniform(k4, (hidden,), jnp.float32, -s2, s2)
    return (w1, b1, w2, b2)


if __name__ == "__main__":
    N = 16                 # batch of timesteps
    FREQ_DIM = 256         # module default frequency_embedding_size
    HIDDEN = 128           # small, lane-aligned hidden size

    key = jax.random.PRNGKey(0)
    kt, kp = jax.random.split(key)
    t = jax.random.uniform(kt, (N,), jnp.float32, 0.0, 1000.0)
    params = init_params(kp, FREQ_DIM, HIDDEN)
    ref = timestep_embedder_reference(t, params, freq_dim=FREQ_DIM)

    # Default (recommended) path: bf16 MXU operands, f32 accumulation/output.
    p_bf16 = prepare_params(params, jnp.bfloat16)   # one-time cast, not per-call
    out_bf = jax.block_until_ready(
        timestep_embedder_forward(t, p_bf16, freq_dim=FREQ_DIM))
    assert out_bf.shape == (N, HIDDEN) and out_bf.dtype == jnp.float32
    assert jnp.allclose(out_bf, ref, atol=1e-1, rtol=5e-2), \
        f"bf16 max abs err {jnp.max(jnp.abs(out_bf - ref))}"

    # f32-operand path (accuracy check; MXU default matmul precision, so keep
    # a tolerance with headroom rather than asserting bit-exactness).
    p_f32 = prepare_params(params, jnp.float32)
    out_f32 = jax.block_until_ready(
        timestep_embedder_forward(t, p_f32, freq_dim=FREQ_DIM))
    assert jnp.allclose(out_f32, ref, atol=5e-4, rtol=5e-4), \
        f"f32 max abs err {jnp.max(jnp.abs(out_f32 - ref))}"

    # Batch not divisible by the row tile exercises the padding + slice path.
    t_odd = jax.random.uniform(jax.random.PRNGKey(1), (13,), jnp.float32,
                               0.0, 1000.0)
    ref_odd = timestep_embedder_reference(t_odd, params, freq_dim=FREQ_DIM)
    out_odd = jax.block_until_ready(
        timestep_embedder_forward(t_odd, p_bf16, freq_dim=FREQ_DIM))
    assert out_odd.shape == (13, HIDDEN)
    assert jnp.allclose(out_odd, ref_odd, atol=1e-1, rtol=5e-2), \
        f"padded-batch max abs err {jnp.max(jnp.abs(out_odd - ref_odd))}"

    print("KERNEL_OK")
</pallas_src>

<mosaic_0001>
module attributes {stable_mosaic.version = 11 : i64} {
  func.func @timestep_embedder_kernel(%arg0: i32, %arg1: memref<8x1xf32, #tpu.memory_space<vmem>>, %arg2: memref<256x128xbf16, #tpu.memory_space<vmem>>, %arg3: memref<1x128xf32, #tpu.memory_space<vmem>>, %arg4: memref<128x128xbf16, #tpu.memory_space<vmem>>, %arg5: memref<1x128xf32, #tpu.memory_space<vmem>>, %arg6: memref<8x128xf32, #tpu.memory_space<vmem>>) attributes {dimension_semantics = [#tpu.dimension_semantics<parallel>], iteration_bounds = array<i64: 2>, scalar_prefetch = 0 : i64, scratch_operands = 0 : i64, tpu.core_type = #tpu.core_type<tc>, window_params = [{transform_indices = @transform_0, window_bounds = array<i64: 8, 1>}, {pipeline_mode = #tpu.pipeline_mode<synchronous>, transform_indices = @transform_1, window_bounds = array<i64: 256, 128>}, {pipeline_mode = #tpu.pipeline_mode<synchronous>, transform_indices = @transform_2, window_bounds = array<i64: 1, 128>}, {pipeline_mode = #tpu.pipeline_mode<synchronous>, transform_indices = @transform_3, window_bounds = array<i64: 128, 128>}, {pipeline_mode = #tpu.pipeline_mode<synchronous>, transform_indices = @transform_4, window_bounds = array<i64: 1, 128>}, {transform_indices = @transform_5, window_bounds = array<i64: 8, 128>}]} {
    %0 = tpu.iota {dimensions = array<i32: 1>} : vector<1x128xi32>
    %1 = arith.sitofp %0 : vector<1x128xi32> to vector<1x128xf32>
    %cst = arith.constant -0.0719557852 : f32
    %2 = vector.broadcast %cst : f32 to vector<1x128xf32>
    %3 = arith.mulf %1, %2 : vector<1x128xf32>
    %4 = math.exp %3 : vector<1x128xf32>
    %c0 = arith.constant 0 : index
    %c0_0 = arith.constant 0 : index
    %5 = vector.load %arg1[%c0, %c0_0] : memref<8x1xf32, #tpu.memory_space<vmem>>, vector<8x1xf32>
    %6 = vector.broadcast %5 : vector<8x1xf32> to vector<8x128xf32>
    %7 = vector.broadcast %4 : vector<1x128xf32> to vector<8x128xf32>
    %8 = arith.mulf %6, %7 : vector<8x128xf32>
    %9 = math.cos %8 : vector<8x128xf32>
    %10 = math.sin %8 : vector<8x128xf32>
    %11 = tpu.concatenate %9, %10 in 1 : vector<8x128xf32>, vector<8x128xf32> -> vector<8x256xf32>
    %12 = arith.truncf %11 : vector<8x256xf32> to vector<8x256xbf16>
    %c0_1 = arith.constant 0 : index
    %c0_2 = arith.constant 0 : index
    %13 = vector.load %arg2[%c0_1, %c0_2] : memref<256x128xbf16, #tpu.memory_space<vmem>>, vector<256x128xbf16>
    %cst_3 = arith.constant dense<0.000000e+00> : vector<8x128xf32>
    %14 = tpu.matmul %12, %13, %cst_3 {dimension_numbers = #tpu.dot_dimension_numbers<[1], [0], [0], [1], [0, 0, 1, 1], [], []>} : vector<8x256xbf16>, vector<256x128xbf16>, vector<8x128xf32> -> vector<8x128xf32>
    %c0_4 = arith.constant 0 : index
    %c0_5 = arith.constant 0 : index
    %15 = vector.load %arg3[%c0_4, %c0_5] : memref<1x128xf32, #tpu.memory_space<vmem>>, vector<1x128xf32>
    %16 = vector.broadcast %15 : vector<1x128xf32> to vector<8x128xf32>
    %17 = arith.addf %14, %16 : vector<8x128xf32>
    %18 = arith.negf %17 : vector<8x128xf32>
    %19 = math.exp %18 : vector<8x128xf32>
    %cst_6 = arith.constant 1.000000e+00 : f32
    %20 = vector.broadcast %cst_6 : f32 to vector<8x128xf32>
    %21 = arith.addf %20, %19 : vector<8x128xf32>
    %22 = arith.divf %20, %21 : vector<8x128xf32>
    %23 = arith.mulf %17, %22 : vector<8x128xf32>
    %24 = arith.truncf %23 : vector<8x128xf32> to vector<8x128xbf16>
    %c0_7 = arith.constant 0 : index
    %c0_8 = arith.constant 0 : index
    %25 = vector.load %arg4[%c0_7, %c0_8] : memref<128x128xbf16, #tpu.memory_space<vmem>>, vector<128x128xbf16>
    %cst_9 = arith.constant dense<0.000000e+00> : vector<8x128xf32>
    %26 = tpu.matmul %24, %25, %cst_9 {dimension_numbers = #tpu.dot_dimension_numbers<[1], [0], [0], [1], [0, 0, 1, 1], [], []>} : vector<8x128xbf16>, vector<128x128xbf16>, vector<8x128xf32> -> vector<8x128xf32>
    %c0_10 = arith.constant 0 : index
    %c0_11 = arith.constant 0 : index
    %27 = vector.load %arg5[%c0_10, %c0_11] : memref<1x128xf32, #tpu.memory_space<vmem>>, vector<1x128xf32>
    %28 = vector.broadcast %27 : vector<1x128xf32> to vector<8x128xf32>
    %29 = arith.addf %26, %28 : vector<8x128xf32>
    %c0_12 = arith.constant 0 : index
    %c0_13 = arith.constant 0 : index
    %30 = vector.load %arg6[%c0_12, %c0_13] : memref<8x128xf32, #tpu.memory_space<vmem>>, vector<8x128xf32>
    tpu.vector_store %arg6[%c0_12, %c0_13], %29 {strides = array<i32>} : memref<8x128xf32, #tpu.memory_space<vmem>>, vector<8x128xf32>,
    return
  }
  func.func @transform_0(%arg0: i32) -> (i32, i32) {
    %c0_i32 = arith.constant 0 : i32
    %c0_i32_0 = arith.constant 0 : i32
    return %arg0, %c0_i32 : i32, i32
  }
  func.func @transform_1(%arg0: i32) -> (i32, i32) {
    %c0_i32 = arith.constant 0 : i32
    %c0_i32_0 = arith.constant 0 : i32
    %c0_i32_1 = arith.constant 0 : i32
    return %c0_i32, %c0_i32_0 : i32, i32
  }
  func.func @transform_2(%arg0: i32) -> (i32, i32) {
    %c0_i32 = arith.constant 0 : i32
    %c0_i32_0 = arith.constant 0 : i32
    %c0_i32_1 = arith.constant 0 : i32
    return %c0_i32, %c0_i32_0 : i32, i32
  }
  func.func @transform_3(%arg0: i32) -> (i32, i32) {
    %c0_i32 = arith.constant 0 : i32
    %c0_i32_0 = arith.constant 0 : i32
    %c0_i32_1 = arith.constant 0 : i32
    return %c0_i32, %c0_i32_0 : i32, i32
  }
  func.func @transform_4(%arg0: i32) -> (i32, i32) {
    %c0_i32 = arith.constant 0 : i32
    %c0_i32_0 = arith.constant 0 : i32
    %c0_i32_1 = arith.constant 0 : i32
    return %c0_i32, %c0_i32_0 : i32, i32
  }
  func.func @transform_5(%arg0: i32) -> (i32, i32) {
    %c0_i32 = arith.constant 0 : i32
    %c0_i32_0 = arith.constant 0 : i32
    return %arg0, %c0_i32 : i32, i32
  }
}

</mosaic_0001>

<llo_original>
// kernel: tpu_custom_call.1
$region0: #{tpu_custom_call.1}
  #allocation0 [shape = 'u32[]', space=smem, size = 0x4, offset = 0x4, fixed_abs, tag = 'smem constant byte address 0x4 - core index']
  #allocation1 [shape = 'u32[144,128]{1,0:T(1,128)}', space=vmem, size = 0x12000, scoped, tag = 'internal scratch']
  %s0 = inlined_call_operand.vmem [shape: f32[16,1], index: 0, kind: input, shape index: {}]
  %s1 = inlined_call_operand.hbm [shape: bf16[256,128], index: 1, kind: input, shape index: {}]
  %s2 = inlined_call_operand.vmem [shape: f32[1,128], index: 2, kind: input, shape index: {}]
  %s3 = inlined_call_operand.hbm [shape: bf16[128,128], index: 3, kind: input, shape index: {}]
  %s4 = inlined_call_operand.vmem [shape: f32[1,128], index: 4, kind: input, shape index: {}]
  %s5 = inlined_call_operand.hbm [shape: f32[16,128], index: 5, kind: output, shape index: {}]
  %s6 = sld [smem:[#allocation0]]
  $region61: #{tpu_custom_call.1} parent=0
    _
  %s8 = ssub.s32 1, %s6
  %s9 = scalar_select 0, %s8, %s6
  $region1: #{tpu_custom_call.1} parent=0
    #allocation2 [shape = 'u8[65536]{0}', space=vmem, size = 0x10000, scoped, tag = 'input window, operand 1, single buffered']
    #allocation3 [shape = 's32[2]{0}', space=sflag, size = 0x8, scoped, tag = 'scoped memory for tpu_custom_call.1']
    #allocation4 [shape = 's32[2]{0}', space=sflag, size = 0x8, scoped, tag = 'scoped memory for tpu_custom_call.1']
    #allocation5 [shape = 'u8[32768]{0}', space=vmem, size = 0x8000, scoped, tag = 'input window, operand 3, single buffered']
    #allocation6 [shape = 's32[1]{0}', space=sflag, size = 0x4, scoped, tag = 'scoped memory for tpu_custom_call.1']
    #allocation7 [shape = 'u8[8192]{0}', space=vmem, size = 0x2000, scoped, tag = 'output window, operand 0']
    %10 = vsyncpa [#allocation3], 0
    %11 = vsyncpa [#allocation6], 0
    %12 = vsyncpa [#allocation4], 0
    %s13 = scalar_lea.sflag [#allocation4], 1
    %14 = vsyncpa %s13, 0
    loop: start=0, step=1, limit=4
    $region2: #{tpu_custom_call.1} parent=1 // loop_pre_header
      _
    $region3: #{tpu_custom_call.1} parent=1 // loop_header
      %s16 = sphi 0, %s20
      %p17 = scmp.ge.s32.totalorder %s16, 4
      %s26 = sphi 0, %s28
      %s29 = sphi 0, %s26
      %s30 = sphi 0, %s29
      %s46 = sphi 0, %s30
      %s50 = sphi 0, %s50
      %s52 = sphi 0, %s50
      %s53 = sphi 0, %s52
      %s67 = sphi 0, %s53
      %s71 = sphi 0, %s71
      %s73 = sphi 0, %s71
      %s74 = sphi 0, %s73
      %s88 = sphi 0, %s74
      %s92 = sphi 0, %s92
      %s94 = sphi 0, %s92
      %s95 = sphi 0, %s94
      %s109 = sphi 0, %s95
      %s113 = sphi 0, %s113
      %s115 = sphi 0, %s113
      %s116 = sphi 0, %s115
      %s130 = sphi 0, %s116
      %s136 = sphi 0, %s138
      %s139 = sphi 0, %s136
      %s140 = sphi 0, %s139
      %s156 = sphi 0, %s140
    $region4: #{tpu_custom_call.1} parent=1 // loop_header_branch
      %19 = sbr.rel (%p17) target = $region8
    $region5: #{tpu_custom_call.1} parent=1 // loop_body
      %s21 = ssub.s32 %s16, 1
      %s22 = ssub.s32 %s16, 2
      %s23 = sadd.s32 %s16, 1
      %s24 = ssub.s32 %s16, %s23
      %p25 = scmp.eq.s32.totalorder %s24, 0
      %s27 = sadd.s32 %s26, 1
      %s28 = scalar_select %p25, %s26, %s27
      %p31 = pneg %p25
      %p32 = scmp.eq.s32.totalorder %s16, 1
      %p33 = por %p31, %p32
      %p34 = scmp.ne.s32.totalorder %s26, %s29
      %p35 = scmp.eq.s32.totalorder %s16, 0
      %p36 = por %p34, %p35
      %p37 = scmp.ne.s32.totalorder %s26, %s29
      %p38 = scmp.eq.s32.totalorder %s21, 1
      %p39 = por %p37, %p38
      %p40 = scmp.ne.s32.totalorder %s29, %s30
      %p41 = scmp.eq.s32.totalorder %s21, 0
      %p42 = por %p40, %p41
      %p43 = scmp.ne.s32.totalorder %s29, %s30
      %p44 = scmp.eq.s32.totalorder %s22, 1
      %p45 = por %p43, %p44
      %p47 = scmp.ne.s32.totalorder %s30, %s46
      %p48 = scmp.eq.s32.totalorder %s22, 0
      %p49 = por %p47, %p48
      %s51 = sadd.s32 %s50, 1
      %p54 = scmp.eq.s32.totalorder %s16, 1
      %p55 = scmp.ne.s32.totalorder %s50, %s52
      %p56 = scmp.eq.s32.totalorder %s16, 0
      %p57 = por %p55, %p56
      %p58 = scmp.ne.s32.totalorder %s50, %s52
      %p59 = scmp.eq.s32.totalorder %s21, 1
      %p60 = por %p58, %p59
      %p61 = scmp.ne.s32.totalorder %s52, %s53
      %p62 = scmp.eq.s32.totalorder %s21, 0
      %p63 = por %p61, %p62
      %p64 = scmp.ne.s32.totalorder %s52, %s53
      %p65 = scmp.eq.s32.totalorder %s22, 1
      %p66 = por %p64, %p65
      %p68 = scmp.ne.s32.totalorder %s53, %s67
      %p69 = scmp.eq.s32.totalorder %s22, 0
      %p70 = por %p68, %p69
      %s72 = sadd.s32 %s71, 1
      %p75 = scmp.eq.s32.totalorder %s16, 1
      %p76 = scmp.ne.s32.totalorder %s71, %s73
      %p77 = scmp.eq.s32.totalorder %s16, 0
      %p78 = por %p76, %p77
      %p79 = scmp.ne.s32.totalorder %s71, %s73
      %p80 = scmp.eq.s32.totalorder %s21, 1
      %p81 = por %p79, %p80
      %p82 = scmp.ne.s32.totalorder %s73, %s74
      %p83 = scmp.eq.s32.totalorder %s21, 0
      %p84 = por %p82, %p83
      %p85 = scmp.ne.s32.totalorder %s73, %s74
      %p86 = scmp.eq.s32.totalorder %s22, 1
      %p87 = por %p85, %p86
      %p89 = scmp.ne.s32.totalorder %s74, %s88
      %p90 = scmp.eq.s32.totalorder %s22, 0
      %p91 = por %p89, %p90
      %s93 = sadd.s32 %s92, 1
      %p96 = scmp.eq.s32.totalorder %s16, 1
      %p97 = scmp.ne.s32.totalorder %s92, %s94
      %p98 = scmp.eq.s32.totalorder %s16, 0
      %p99 = por %p97, %p98
      %p100 = scmp.ne.s32.totalorder %s92, %s94
      %p101 = scmp.eq.s32.totalorder %s21, 1
      %p102 = por %p100, %p101
      %p103 = scmp.ne.s32.totalorder %s94, %s95
      %p104 = scmp.eq.s32.totalorder %s21, 0
      %p105 = por %p103, %p104
      %p106 = scmp.ne.s32.totalorder %s94, %s95
      %p107 = scmp.eq.s32.totalorder %s22, 1
      %p108 = por %p106, %p107
      %p110 = scmp.ne.s32.totalorder %s95, %s109
      %p111 = scmp.eq.s32.totalorder %s22, 0
      %p112 = por %p110, %p111
      %s114 = sadd.s32 %s113, 1
      %p117 = scmp.eq.s32.totalorder %s16, 1
      %p118 = scmp.ne.s32.totalorder %s113, %s115
      %p119 = scmp.eq.s32.totalorder %s16, 0
      %p120 = por %p118, %p119
      %p121 = scmp.ne.s32.totalorder %s113, %s115
      %p122 = scmp.eq.s32.totalorder %s21, 1
      %p123 = por %p121, %p122
      %p124 = scmp.ne.s32.totalorder %s115, %s116
      %p125 = scmp.eq.s32.totalorder %s21, 0
      %p126 = por %p124, %p125
      %p127 = scmp.ne.s32.totalorder %s115, %s116
      %p128 = scmp.eq.s32.totalorder %s22, 1
      %p129 = por %p127, %p128
      %p131 = scmp.ne.s32.totalorder %s116, %s130
      %p132 = scmp.eq.s32.totalorder %s22, 0
      %p133 = por %p131, %p132
      %s134 = ssub.s32 %s16, %s23
      %p135 = scmp.eq.s32.totalorder %s134, 0
      %s137 = sadd.s32 %s136, 1
      %s138 = scalar_select %p135, %s136, %s137
      %p141 = pneg %p135
      %p142 = scmp.eq.s32.totalorder %s16, 1
      %p143 = por %p141, %p142
      %p144 = scmp.ne.s32.totalorder %s136, %s139
      %p145 = scmp.eq.s32.totalorder %s16, 0
      %p146 = por %p144, %p145
      %p147 = scmp.ne.s32.totalorder %s136, %s139
      %p148 = scmp.eq.s32.totalorder %s21, 1
      %p149 = por %p147, %p148
      %p150 = scmp.ne.s32.totalorder %s139, %s140
      %p151 = scmp.eq.s32.totalorder %s21, 0
      %p152 = por %p150, %p151
      %p153 = scmp.ne.s32.totalorder %s139, %s140
      %p154 = scmp.eq.s32.totalorder %s22, 1
      %p155 = por %p153, %p154
      %p157 = scmp.ne.s32.totalorder %s140, %s156
      %p158 = scmp.eq.s32.totalorder %s22, 0
      %p159 = por %p157, %p158
      %p160 = scmp.le.s32.totalorder 1, %s16
      %p161 = scmp.lt.s32.totalorder %s16, 3
      %p162 = pnand %p160, %p161
      %p163 = pneg %p162
      // Predicated region
      $region9: #{tpu_custom_call.1} parent=5 // pred_check
        _
      $region10: #{tpu_custom_call.1} parent=5 // pred_check_branch
        %165 = sbr.rel (%p162) target = $region12
      $region11: #{tpu_custom_call.1} parent=5 // pred_region
        %s166 = ssub.s32 %s16, 1
        // Predicated region
        $region13: #{tpu_custom_call.1} parent=11 // pred_check
          %p167 = pneg %p63
        $region14: #{tpu_custom_call.1} parent=11 // pred_check_branch
          %169 = sbr.rel (%p167) target = $region16
        $region15: #{tpu_custom_call.1} parent=11 // pred_region
          %s171 = ssub.s32 2048, 2048
          %172 = vsyncadd [#allocation3], %s171
          %s173 = sshll.u32 [#allocation2], 4
          %s174 = int_to_ptr.vmem [resolvable:$true] %s173
          %179 = dma.hbm_to_vmem [thread:$0]  %s1, 2048, %s174, [#allocation3], 64, 64, 4
        $region16: #{tpu_custom_call.1} parent=11 // pred_fallthru
          _
        // Predicated region
        $region17: #{tpu_custom_call.1} parent=11 // pred_check
          %p180 = pneg %p84
        $region18: #{tpu_custom_call.1} parent=11 // pred_check_branch
          %182 = sbr.rel (%p180) target = $region20
        $region19: #{tpu_custom_call.1} parent=11 // pred_region
          _
        $region20: #{tpu_custom_call.1} parent=11 // pred_fallthru
          _
        // Predicated region
        $region21: #{tpu_custom_call.1} parent=11 // pred_check
          %p183 = pneg %p105
        $region22: #{tpu_custom_call.1} parent=11 // pred_check_branch
          %185 = sbr.rel (%p183) target = $region24
        $region23: #{tpu_custom_call.1} parent=11 // pred_region
          %s187 = ssub.s32 1024, 1024
          %188 = vsyncadd [#allocation6], %s187
          %s189 = sshll.u32 [#allocation5], 4
          %s190 = int_to_ptr.vmem [resolvable:$true] %s189
          %195 = dma.hbm_to_vmem [thread:$0]  %s3, 1024, %s190, [#allocation6], 64, 64, 4
        $region24: #{tpu_custom_call.1} parent=11 // pred_fallthru
          _
        // Predicated region
        $region25: #{tpu_custom_call.1} parent=11 // pred_check
          %p196 = pneg %p126
        $region26: #{tpu_custom_call.1} parent=11 // pred_check_branch
          %198 = sbr.rel (%p196) target = $region28
        $region27: #{tpu_custom_call.1} parent=11 // pred_region
          _
        $region28: #{tpu_custom_call.1} parent=11 // pred_fallthru
          _
      $region12: #{tpu_custom_call.1} parent=5 // pred_fallthru
        _
      %p199 = scmp.lt.s32.totalorder %s16, 2
      // Predicated region
      $region29: #{tpu_custom_call.1} parent=5 // pred_check
        %p200 = pneg %p199
      $region30: #{tpu_custom_call.1} parent=5 // pred_check_branch
        %202 = sbr.rel (%p200) target = $region32
      $region31: #{tpu_custom_call.1} parent=5 // pred_region
        // Predicated region
        $region33: #{tpu_custom_call.1} parent=31 // pred_check
          %p203 = pneg %p36
        $region34: #{tpu_custom_call.1} parent=31 // pred_check_branch
          %205 = sbr.rel (%p203) target = $region36
        $region35: #{tpu_custom_call.1} parent=31 // pred_region
          %p206 = scmp.lt.s32.totalorder %s16, 1
          %s207 = scalar_select %p206, %s16, 1
          %s208 = smul.addr %s207, 8
          %s209 = scalar_lea.vmem %s0, %s208
        $region36: #{tpu_custom_call.1} parent=31 // pred_fallthru
          _
      $region32: #{tpu_custom_call.1} parent=5 // pred_fallthru
        _
      %p210 = scmp.le.s32.totalorder 1, %s16
      %p211 = scmp.lt.s32.totalorder %s16, 3
      %p212 = pnand %p210, %p211
      %p213 = pneg %p212
      // Predicated region
      $region37: #{tpu_custom_call.1} parent=5 // pred_check
        _
      $region38: #{tpu_custom_call.1} parent=5 // pred_check_branch
        %215 = sbr.rel (%p212) target = $region40
      $region39: #{tpu_custom_call.1} parent=5 // pred_region
        %s216 = ssub.s32 %s16, 1
        // Predicated region
        $region41: #{tpu_custom_call.1} parent=39 // pred_check
          %p217 = pneg %p63
        $region42: #{tpu_custom_call.1} parent=39 // pred_check_branch
          %219 = sbr.rel (%p217) target = $region44
        $region43: #{tpu_custom_call.1} parent=39 // pred_region
          %220 = dma.done [#allocation3], 2048
        $region44: #{tpu_custom_call.1} parent=39 // pred_fallthru
          _
        // Predicated region
        $region45: #{tpu_custom_call.1} parent=39 // pred_check
          %p221 = pneg %p105
        $region46: #{tpu_custom_call.1} parent=39 // pred_check_branch
          %223 = sbr.rel (%p221) target = $region48
        $region47: #{tpu_custom_call.1} parent=39 // pred_region
          %224 = dma.done [#allocation6], 1024
        $region48: #{tpu_custom_call.1} parent=39 // pred_fallthru
          _
        %p225 = scmp.lt.s32.totalorder %s21, 1
        %s226 = scalar_select %p225, %s21, 1
        %s227 = smul.addr %s226, 8
        %s228 = scalar_lea.vmem %s0, %s227
        %p229 = pneg %p42
        %p230 = pneg %p39
        %p231 = pneg %p63
        %p232 = pneg %p60
        %p233 = pneg %p84
        %p234 = pneg %p81
        %p235 = pneg %p105
        %p236 = pneg %p102
        %p237 = pneg %p126
        %p238 = pneg %p123
        %p239 = pneg %p152
        %p240 = pneg %p149
        %s241 = sand.u32 %s139, 1
        %s242 = scalar_lea.sflag [#allocation4], %s241
        %s243 = sand.u32 %s139, 1
        %s244 = smul.addr %s243, 8
        %s245 = scalar_lea.vmem [#allocation7], %s244
        %p246 = scmp.lt.s32.totalorder %s21, 1
        %s247 = scalar_select %p246, %s21, 1
        %s248 = smul.addr %s247, 8
        %s249 = scalar_lea.vmem %s0, %s248
        %v251 = vlaneseq
        %v252 = vand.u32 %v251, 127
        %v253 = vcvt.s32.f32 %v252
        %v254 = vmul.f32 %v253, -0.071955785
        %v255 = vmul.f32 %v254, 1.442695
        %v256 = vpow.pop %v255
        %v257 = vld [vmem:[%s249] sm:$0xff]
        %259 = vset.pattern.permute.xlu0 0
        %260 = vperm.xlu0 %259, %v257
        %v261 = vpop.permute.xlu0 %260
        %v263 = vmul.f32 %v261, %v256
        %v264 = vand.u32 2147483647, %v263
        %vm265 = vcmp.le.f32.partialorder %v264, 0.7853982
        %vm266 = vcmp.lt.s32.totalorder %v263, 0
        %v267 = vand.u32 %v263, 2139095040
        %v268 = vshrl.u32 %v267, 23
        %v269 = vsub.s32 %v268, 127
        %v270 = vand.u32 2147483647, %v263
        %v271 = vand.u32 %v270, 8388607
        %v272 = vor.u32 %v271, 8388608
        %v273 = vsub.s32 0, %v272
        %v274 = vadd.s32 %v269, 1
        %vm275 = vcmp.gt.s32.totalorder %v274, 0
        %v276 = vsel %vm275, %v274, 0
        %v277 = vshrl.u32 %v276, 5
        %v278 = vand.u32 %v276, 31
        %v279 = vsub.s32 32, %v278
        %v280 = vshrl.u32 683565275, %v279
        %v281 = vshll.u32 683565275, %v278
        %v282 = vshrl.u32 2475754826, %v279
        %v283 = vor.u32 %v281, %v282
        %v284 = vshll.u32 2475754826, %v278
        %v285 = vshrl.u32 2131351028, %v279
        %v286 = vor.u32 %v284, %v285
        %v287 = vshll.u32 2131351028, %v278
        %v288 = vshrl.u32 2102212464, %v279
        %v289 = vor.u32 %v287, %v288
        %v290 = vshll.u32 2102212464, %v278
        %v291 = vshrl.u32 920167782, %v279
        %v292 = vor.u32 %v290, %v291
        %v293 = vshll.u32 920167782, %v278
        %v294 = vshrl.u32 1326507024, %v279
        %v295 = vor.u32 %v293, %v294
        %vm296 = vcmp.lt.s32.totalorder %v277, 1
        %vm297 = vcmp.lt.s32.totalorder %v277, 2
        %vm298 = vcmp.lt.s32.totalorder %v277, 3
        %vm299 = vcmp.lt.s32.totalorder %v277, 4
        %v300 = vsel %vm296, %v280, %v283
        %v301 = vsel %vm299, %v289, 2102212464
        %v302 = vsel %vm298, %v286, %v301
        %v303 = vsel %vm297, %v300, %v302
        %v304 = vsel %vm296, %v283, %v286
        %v305 = vsel %vm299, %v292, 920167782
        %v306 = vsel %vm298, %v289, %v305
        %v307 = vsel %vm297, %v304, %v306
        %v308 = vsel %vm296, %v286, %v289
        %v309 = vsel %vm299, %v295, 1326507024
        %v310 = vsel %vm298, %v292, %v309
        %v311 = vsel %vm297, %v308, %v310
        %v312 = vshll.u32 %v272, 8
        %v313 = vmul.u32.u64.compose %v312, %v311
        %v314 = vextract.low.u32 %v313
        %v315 = vextract.high.u32 %v313
        %v316 = vmul.u32.u64.compose %v312, %v307
        %v317 = vextract.low.u32 %v316
        %v318 = vextract.high.u32 %v316
        %v319 = vmul.u32 %v312, %v303
        %v320 = vadd.s32 %v315, %v317
        %vm321 = vc.u32 %v315, %v317
        %v322 = vadd.s32 %v318, 1
        %v323 = vsel %vm321, %v322, %v318
        %v324 = vadd.s32 %v319, %v323
        %v325 = vadd.s32 %v324, 536870912
        %v326 = vshrl.u32 %v325, 30
        %v327 = vshll.u32 %v326, 30
        %v328 = vsub.s32 %v324, %v327
        %vm329 = vcmp.lt.s32.totalorder %v328, 0
        %v330 = vsub.s32 0, %v328
        %v331 = vsel %vm329, %v330, %v328
        %v332 = vclz %v331
        %v333 = vsub.s32 %v332, 2
        %vm334 = vcmp.gt.s32.totalorder 0, %v333
        %v335 = vsel %vm334, 0, %v333
        %v336 = vsub.s32 32, %v335
        %v337 = vshll.u32 %v328, %v335
        %v338 = vshrl.u32 %v320, %v336
        %v339 = vor.u32 %v337, %v338
        %v340 = vsub.s32 4294967266, %v335
        %v341 = vadd.s32 %v340, 127
        %v342 = vshll.u32 %v341, 23
        %v343 = vor.u32 4788187, %v342
        %v344 = vand.u32 2147483647, %v343
        %v346 = vcvt.s32.f32 %v339
        %v347 = vmul.f32 %v346, %v344
        %v348 = vxor.u32 %v347, 2147483648
        %v349 = vsel %vm266, %v348, %v347
        %v350 = vsub.s32 4, %v326
        %v351 = vsel %vm266, %v350, %v326
        %v352 = vsel %vm265, %v263, %v349
        %v353 = vsel %vm265, 0, %v351
        %v354 = vcosq.f32.pop %v352
        %v355 = vsinq.f32.pop %v352
        %vm356 = vweird.f32 %v263
        %v357 = vand.u32 %v353, 3
        %vm358 = vcmp.lt.s32.totalorder %v357, 2
        %vm359 = vcmp.eq.s32.totalorder %v357, 0
        %v360 = vxor.u32 %v355, 2147483648
        %v361 = vsel %vm359, %v354, %v360
        %vm362 = vcmp.eq.s32.totalorder %v357, 2
        %v363 = vxor.u32 %v354, 2147483648
        %v364 = vsel %vm362, %v363, %v355
        %v365 = vsel %vm358, %v361, %v364
        %v366 = vsel %vm356, nan, %v365
        %v367 = vand.u32 2147483647, %v263
        %vm368 = vcmp.le.f32.partialorder %v367, 0.7853982
        %vm369 = vcmp.lt.s32.totalorder %v263, 0
        %v370 = vand.u32 %v263, 2139095040
        %v371 = vshrl.u32 %v370, 23
        %v372 = vsub.s32 %v371, 127
        %v373 = vand.u32 2147483647, %v263
        %v374 = vand.u32 %v373, 8388607
        %v375 = vor.u32 %v374, 8388608
        %v376 = vsub.s32 0, %v375
        %v377 = vadd.s32 %v372, 1
        %vm378 = vcmp.gt.s32.totalorder %v377, 0
        %v379 = vsel %vm378, %v377, 0
        %v380 = vshrl.u32 %v379, 5
        %v381 = vand.u32 %v379, 31
        %v382 = vsub.s32 32, %v381
        %v383 = vshrl.u32 683565275, %v382
        %v384 = vshll.u32 683565275, %v381
        %v385 = vshrl.u32 2475754826, %v382
        %v386 = vor.u32 %v384, %v385
        %v387 = vshll.u32 2475754826, %v381
        %v388 = vshrl.u32 2131351028, %v382
        %v389 = vor.u32 %v387, %v388
        %v390 = vshll.u32 2131351028, %v381
        %v391 = vshrl.u32 2102212464, %v382
        %v392 = vor.u32 %v390, %v391
        %v393 = vshll.u32 2102212464, %v381
        %v394 = vshrl.u32 920167782, %v382
        %v395 = vor.u32 %v393, %v394
        %v396 = vshll.u32 920167782, %v381
        %v397 = vshrl.u32 1326507024, %v382
        %v398 = vor.u32 %v396, %v397
        %vm399 = vcmp.lt.s32.totalorder %v380, 1
        %vm400 = vcmp.lt.s32.totalorder %v380, 2
        %vm401 = vcmp.lt.s32.totalorder %v380, 3
        %vm402 = vcmp.lt.s32.totalorder %v380, 4
        %v403 = vsel %vm399, %v383, %v386
        %v404 = vsel %vm402, %v392, 2102212464
        %v405 = vsel %vm401, %v389, %v404
        %v406 = vsel %vm400, %v403, %v405
        %v407 = vsel %vm399, %v386, %v389
        %v408 = vsel %vm402, %v395, 920167782
        %v409 = vsel %vm401, %v392, %v408
        %v410 = vsel %vm400, %v407, %v409
        %v411 = vsel %vm399, %v389, %v392
        %v412 = vsel %vm402, %v398, 1326507024
        %v413 = vsel %vm401, %v395, %v412
        %v414 = vsel %vm400, %v411, %v413
        %v415 = vshll.u32 %v375, 8
        %v416 = vmul.u32.u64.compose %v415, %v414
        %v417 = vextract.low.u32 %v416
        %v418 = vextract.high.u32 %v416
        %v419 = vmul.u32.u64.compose %v415, %v410
        %v420 = vextract.low.u32 %v419
        %v421 = vextract.high.u32 %v419
        %v422 = vmul.u32 %v415, %v406
        %v423 = vadd.s32 %v418, %v420
        %vm424 = vc.u32 %v418, %v420
        %v425 = vadd.s32 %v421, 1
        %v426 = vsel %vm424, %v425, %v421
        %v427 = vadd.s32 %v422, %v426
        %v428 = vadd.s32 %v427, 536870912
        %v429 = vshrl.u32 %v428, 30
        %v430 = vshll.u32 %v429, 30
        %v431 = vsub.s32 %v427, %v430
        %vm432 = vcmp.lt.s32.totalorder %v431, 0
        %v433 = vsub.s32 0, %v431
        %v434 = vsel %vm432, %v433, %v431
        %v435 = vclz %v434
        %v436 = vsub.s32 %v435, 2
        %vm437 = vcmp.gt.s32.totalorder 0, %v436
        %v438 = vsel %vm437, 0, %v436
        %v439 = vsub.s32 32, %v438
        %v440 = vshll.u32 %v431, %v438
        %v441 = vshrl.u32 %v423, %v439
        %v442 = vor.u32 %v440, %v441
        %v443 = vsub.s32 4294967266, %v438
        %v444 = vadd.s32 %v443, 127
        %v445 = vshll.u32 %v444, 23
        %v446 = vor.u32 4788187, %v445
        %v447 = vand.u32 2147483647, %v446
        %v449 = vcvt.s32.f32 %v442
        %v450 = vmul.f32 %v449, %v447
        %v451 = vxor.u32 %v450, 2147483648
        %v452 = vsel %vm369, %v451, %v450
        %v453 = vsub.s32 4, %v429
        %v454 = vsel %vm369, %v453, %v429
        %v455 = vsel %vm368, %v263, %v452
        %v456 = vsel %vm368, 0, %v454
        %v457 = vcosq.f32.pop %v455
        %v458 = vsinq.f32.pop %v455
        %vm459 = vweird.f32 %v263
        %v460 = vadd.s32 %v456, 3
        %v461 = vand.u32 %v460, 3
        %vm462 = vcmp.lt.s32.totalorder %v461, 2
        %vm463 = vcmp.eq.s32.totalorder %v461, 0
        %v464 = vxor.u32 %v458, 2147483648
        %v465 = vsel %vm463, %v457, %v464
        %vm466 = vcmp.eq.s32.totalorder %v461, 2
        %v467 = vxor.u32 %v457, 2147483648
        %v468 = vsel %vm466, %v467, %v458
        %v469 = vsel %vm462, %v465, %v468
        %v470 = vsel %vm459, nan, %v469
        %v471 = vpack.c.bf16 %v366, %v366
        %v472 = vpack.c.bf16 %v470, %v470
        %v473 = vld [vmem:[#allocation2] sm:$0xf]
        %v474 = vld [vmem:[#allocation2 + $0x4] sm:$0xf]
        %v475 = vld [vmem:[#allocation2 + $0x8] sm:$0xf]
        %v476 = vld [vmem:[#allocation2 + $0xc] sm:$0xf]
        %v477 = vld [vmem:[#allocation2 + $0x10] sm:$0xf]
        %v478 = vld [vmem:[#allocation2 + $0x14] sm:$0xf]
        %v479 = vld [vmem:[#allocation2 + $0x18] sm:$0xf]
        %v480 = vld [vmem:[#allocation2 + $0x1c] sm:$0xf]
        %v481 = vld [vmem:[#allocation2 + $0x20] sm:$0xf]
        %v482 = vld [vmem:[#allocation2 + $0x24] sm:$0xf]
        %v483 = vld [vmem:[#allocation2 + $0x28] sm:$0xf]
        %v484 = vld [vmem:[#allocation2 + $0x2c] sm:$0xf]
        %v485 = vld [vmem:[#allocation2 + $0x30] sm:$0xf]
        %v486 = vld [vmem:[#allocation2 + $0x34] sm:$0xf]
        %v487 = vld [vmem:[#allocation2 + $0x38] sm:$0xf]
        %v488 = vld [vmem:[#allocation2 + $0x3c] sm:$0xf]
        %v489 = vld [vmem:[#allocation2 + $0x40] sm:$0xf]
        %v490 = vld [vmem:[#allocation2 + $0x44] sm:$0xf]
        %v491 = vld [vmem:[#allocation2 + $0x48] sm:$0xf]
        %v492 = vld [vmem:[#allocation2 + $0x4c] sm:$0xf]
        %v493 = vld [vmem:[#allocation2 + $0x50] sm:$0xf]
        %v494 = vld [vmem:[#allocation2 + $0x54] sm:$0xf]
        %v495 = vld [vmem:[#allocation2 + $0x58] sm:$0xf]
        %v496 = vld [vmem:[#allocation2 + $0x5c] sm:$0xf]
        %v497 = vld [vmem:[#allocation2 + $0x60] sm:$0xf]
        %v498 = vld [vmem:[#allocation2 + $0x64] sm:$0xf]
        %v499 = vld [vmem:[#allocation2 + $0x68] sm:$0xf]
        %v500 = vld [vmem:[#allocation2 + $0x6c] sm:$0xf]
        %v501 = vld [vmem:[#allocation2 + $0x70] sm:$0xf]
        %v502 = vld [vmem:[#allocation2 + $0x74] sm:$0xf]
        %v503 = vld [vmem:[#allocation2 + $0x78] sm:$0xf]
        %v504 = vld [vmem:[#allocation2 + $0x7c] sm:$0xf]
        %v505 = vld [vmem:[%s2] sm:$0x1]
        %v507 = vlaneseq
        %v508 = vshrl.u32 %v507, 7
        %v509 = vsub.s32 0, %v508
        %v510 = vrot.slane %v505, %v509
        %v544 = vunpack.c.l.b16 %v473
        %v545 = vunpack.c.l.b16 %v474
        %v546 = vunpack.c.l.b16 %v475
        %v547 = vunpack.c.l.b16 %v476
        %v548 = vunpack.c.l.b16 %v477
        %v549 = vunpack.c.l.b16 %v478
        %v550 = vunpack.c.l.b16 %v479
        %v551 = vunpack.c.l.b16 %v480
        %v552 = vunpack.c.l.b16 %v481
        %v553 = vunpack.c.l.b16 %v482
        %v554 = vunpack.c.l.b16 %v483
        %v555 = vunpack.c.l.b16 %v484
        %v556 = vunpack.c.l.b16 %v485
        %v557 = vunpack.c.l.b16 %v486
        %v558 = vunpack.c.l.b16 %v487
        %v559 = vunpack.c.l.b16 %v488
        %v560 = vunpack.c.l.b16 %v489
        %v561 = vunpack.c.l.b16 %v490
        %v562 = vunpack.c.l.b16 %v491
        %v563 = vunpack.c.l.b16 %v492
        %v564 = vunpack.c.l.b16 %v493
        %v565 = vunpack.c.l.b16 %v494
        %v566 = vunpack.c.l.b16 %v495
        %v567 = vunpack.c.l.b16 %v496
        %v568 = vunpack.c.l.b16 %v497
        %v569 = vunpack.c.l.b16 %v498
        %v570 = vunpack.c.l.b16 %v499
        %v571 = vunpack.c.l.b16 %v500
        %v572 = vunpack.c.l.b16 %v501
        %v573 = vunpack.c.l.b16 %v502
        %v574 = vunpack.c.l.b16 %v503
        %v575 = vunpack.c.l.b16 %v504
        %v576 = vpack.c.b16 %v545, %v544
        %v577 = vpack.c.b16 %v547, %v546
        %v578 = vpack.c.b16 %v549, %v548
        %v579 = vpack.c.b16 %v551, %v550
        %v580 = vpack.c.b16 %v553, %v552
        %v581 = vpack.c.b16 %v555, %v554
        %v582 = vpack.c.b16 %v557, %v556
        %v583 = vpack.c.b16 %v559, %v558
        %v584 = vpack.c.b16 %v561, %v560
        %v585 = vpack.c.b16 %v563, %v562
        %v586 = vpack.c.b16 %v565, %v564
        %v587 = vpack.c.b16 %v567, %v566
        %v588 = vpack.c.b16 %v569, %v568
        %v589 = vpack.c.b16 %v571, %v570
        %v590 = vpack.c.b16 %v573, %v572
        %v591 = vpack.c.b16 %v575, %v574
        %608 = vmatprep.subr.bf16.mxu0 0
        %609 = vmatpush1.bf16.msra.mxu0 %v576
        %610 = vmatprep.subr.bf16.mxu0 0
        %611 = vmatpush1.bf16.msra.mxu0 %v577
        %612 = vmatprep.subr.bf16.mxu0 0
        %613 = vmatpush1.bf16.msra.mxu0 %v578
        %614 = vmatprep.subr.bf16.mxu0 0
        %615 = vmatpush1.bf16.msra.mxu0 %v579
        %616 = vmatprep.subr.bf16.mxu0 0
        %617 = vmatpush1.bf16.msra.mxu0 %v580
        %618 = vmatprep.subr.bf16.mxu0 0
        %619 = vmatpush1.bf16.msra.mxu0 %v581
        %620 = vmatprep.subr.bf16.mxu0 0
        %621 = vmatpush1.bf16.msra.mxu0 %v582
        %622 = vmatprep.subr.bf16.mxu0 0
        %623 = vmatpush1.bf16.msra.mxu0 %v583
        %624 = vmatprep.subr.bf16.mxu0 0
        %625 = vmatpush1.bf16.msra.mxu0 %v584
        %626 = vmatprep.subr.bf16.mxu0 0
        %627 = vmatpush1.bf16.msra.mxu0 %v585
        %628 = vmatprep.subr.bf16.mxu0 0
        %629 = vmatpush1.bf16.msra.mxu0 %v586
        %630 = vmatprep.subr.bf16.mxu0 0
        %631 = vmatpush1.bf16.msra.mxu0 %v587
        %632 = vmatprep.subr.bf16.mxu0 0
        %633 = vmatpush1.bf16.msra.mxu0 %v588
        %634 = vmatprep.subr.bf16.mxu0 0
        %635 = vmatpush1.bf16.msra.mxu0 %v589
        %636 = vmatprep.subr.bf16.mxu0 0
        %637 = vmatpush1.bf16.msra.mxu0 %v590
        %638 = vmatprep.subr.bf16.mxu0 0
        %639 = vmatpush1.bf16.msra.mxu0 %v591
        %640 = vmatprep.mubr.bf16.mxu0 %v472
        %641 = vmatmul.mubr.bf16.gmra.mrb[0].mxu0 %v471
        %v642 = vpop.f32.mrb[0].mxu0
        %v643 = vadd.f32 %v510, %v642
        %v644 = vpop.f32.mrb[0].mxu0
        %v645 = vpop.f32.mrb[0].mxu0
        %v646 = vpop.f32.mrb[0].mxu0
        %647 = vdwg.mxu0
        %v648 = vxor.u32 %v643, 2147483648
        %v649 = vmul.f32 %v648, 1.442695
        %v650 = vpow.pop %v649
        %v651 = vadd.f32 %v650, 1.0
        %v652 = vrcp.pop %v651
        %v653 = vmul.f32 1.0, %v652
        %v654 = vmul.f32 %v643, %v653
        %v655 = vpack.c.bf16 %v654, %v654
        %v656 = vld [vmem:[#allocation5] sm:$0xf]
        %v657 = vld [vmem:[#allocation5 + $0x4] sm:$0xf]
        %v658 = vld [vmem:[#allocation5 + $0x8] sm:$0xf]
        %v659 = vld [vmem:[#allocation5 + $0xc] sm:$0xf]
        %v660 = vld [vmem:[#allocation5 + $0x10] sm:$0xf]
        %v661 = vld [vmem:[#allocation5 + $0x14] sm:$0xf]
        %v662 = vld [vmem:[#allocation5 + $0x18] sm:$0xf]
        %v663 = vld [vmem:[#allocation5 + $0x1c] sm:$0xf]
        %v664 = vld [vmem:[#allocation5 + $0x20] sm:$0xf]
        %v665 = vld [vmem:[#allocation5 + $0x24] sm:$0xf]
        %v666 = vld [vmem:[#allocation5 + $0x28] sm:$0xf]
        %v667 = vld [vmem:[#allocation5 + $0x2c] sm:$0xf]
        %v668 = vld [vmem:[#allocation5 + $0x30] sm:$0xf]
        %v669 = vld [vmem:[#allocation5 + $0x34] sm:$0xf]
        %v670 = vld [vmem:[#allocation5 + $0x38] sm:$0xf]
        %v671 = vld [vmem:[#allocation5 + $0x3c] sm:$0xf]
        %v672 = vld [vmem:[%s4] sm:$0x1]
        %v674 = vlaneseq
        %v675 = vshrl.u32 %v674, 7
        %v676 = vsub.s32 0, %v675
        %v677 = vrot.slane %v672, %v676
        %v695 = vunpack.c.l.b16 %v656
        %v696 = vunpack.c.l.b16 %v657
        %v697 = vunpack.c.l.b16 %v658
        %v698 = vunpack.c.l.b16 %v659
        %v699 = vunpack.c.l.b16 %v660
        %v700 = vunpack.c.l.b16 %v661
        %v701 = vunpack.c.l.b16 %v662
        %v702 = vunpack.c.l.b16 %v663
        %v703 = vunpack.c.l.b16 %v664
        %v704 = vunpack.c.l.b16 %v665
        %v705 = vunpack.c.l.b16 %v666
        %v706 = vunpack.c.l.b16 %v667
        %v707 = vunpack.c.l.b16 %v668
        %v708 = vunpack.c.l.b16 %v669
        %v709 = vunpack.c.l.b16 %v670
        %v710 = vunpack.c.l.b16 %v671
        %v711 = vpack.c.b16 %v696, %v695
        %v712 = vpack.c.b16 %v698, %v697
        %v713 = vpack.c.b16 %v700, %v699
        %v714 = vpack.c.b16 %v702, %v701
        %v715 = vpack.c.b16 %v704, %v703
        %v716 = vpack.c.b16 %v706, %v705
        %v717 = vpack.c.b16 %v708, %v707
        %v718 = vpack.c.b16 %v710, %v709
        %727 = vmatprep.subr.bf16.mxu0 0
        %728 = vmatpush1.bf16.msra.mxu0 %v711
        %729 = vmatprep.subr.bf16.mxu0 0
        %730 = vmatpush1.bf16.msra.mxu0 %v712
        %731 = vmatprep.subr.bf16.mxu0 0
        %732 = vmatpush1.bf16.msra.mxu0 %v713
        %733 = vmatprep.subr.bf16.mxu0 0
        %734 = vmatpush1.bf16.msra.mxu0 %v714
        %735 = vmatprep.subr.bf16.mxu0 0
        %736 = vmatpush1.bf16.msra.mxu0 %v715
        %737 = vmatprep.subr.bf16.mxu0 0
        %738 = vmatpush1.bf16.msra.mxu0 %v716
        %739 = vmatprep.subr.bf16.mxu0 0
        %740 = vmatpush1.bf16.msra.mxu0 %v717
        %741 = vmatprep.subr.bf16.mxu0 0
        %742 = vmatpush1.bf16.msra.mxu0 %v718
        %743 = vmatprep.subr.bf16.mxu0 0
        %744 = vmatpush1.bf16.msra.mxu0 0
        %745 = vmatprep.subr.bf16.mxu0 0
        %746 = vmatpush1.bf16.msra.mxu0 0
        %747 = vmatprep.subr.bf16.mxu0 0
        %748 = vmatpush1.bf16.msra.mxu0 0
        %749 = vmatprep.subr.bf16.mxu0 0
        %750 = vmatpush1.bf16.msra.mxu0 0
        %751 = vmatprep.subr.bf16.mxu0 0
        %752 = vmatpush1.bf16.msra.mxu0 0
        %753 = vmatprep.subr.bf16.mxu0 0
        %754 = vmatpush1.bf16.msra.mxu0 0
        %755 = vmatprep.subr.bf16.mxu0 0
        %756 = vmatpush1.bf16.msra.mxu0 0
        %757 = vmatprep.subr.bf16.mxu0 0
        %758 = vmatpush1.bf16.msra.mxu0 0
        %759 = vmatprep.mubr.bf16.mxu0 0
        %760 = vmatmul.mubr.bf16.gmra.mrb[0].mxu0 %v655
        %v761 = vpop.f32.mrb[0].mxu0
        %v762 = vadd.f32 %v677, %v761
        %v763 = vpop.f32.mrb[0].mxu0
        %v764 = vpop.f32.mrb[0].mxu0
        %v765 = vpop.f32.mrb[0].mxu0
        %766 = vdwg.mxu0
        %767 = vst [vmem:[%s245] sm:$0xff] %v762
        %s768 = sand.u32 %s139, 1
        %s769 = scalar_lea.sflag [#allocation4], %s768
        %s770 = sand.u32 %s139, 1
        %s771 = smul.addr %s770, 8
        %s772 = scalar_lea.vmem [#allocation7], %s771
        // Predicated region
        $region49: #{tpu_custom_call.1} parent=39 // pred_check
          %p773 = pneg %p149
        $region50: #{tpu_custom_call.1} parent=39 // pred_check_branch
          %775 = sbr.rel (%p773) target = $region52
        $region51: #{tpu_custom_call.1} parent=39 // pred_region
          %s777 = ssub.s32 128, 128
          %778 = vsyncadd %s769, %s777
          %s779 = smul.addr %s21, 128
          %s780 = scalar_lea.hbm %s5, %s779
          %s782 = sshll.u32 %s772, 4
          %s783 = int_to_ptr.vmem [resolvable:$true] %s782
          %785 = dma.vmem_to_hbm [thread:$0]  %s783, 128, %s780, %s769
        $region52: #{tpu_custom_call.1} parent=39 // pred_fallthru
          _
      $region40: #{tpu_custom_call.1} parent=5 // pred_fallthru
        _
      %p786 = scmp.le.s32.totalorder 2, %s16
      // Predicated region
      $region53: #{tpu_custom_call.1} parent=5 // pred_check
        %p787 = pneg %p786
      $region54: #{tpu_custom_call.1} parent=5 // pred_check_branch
        %789 = sbr.rel (%p787) target = $region56
      $region55: #{tpu_custom_call.1} parent=5 // pred_region
        %s790 = ssub.s32 %s16, 2
        // Predicated region
        $region57: #{tpu_custom_call.1} parent=55 // pred_check
          %p791 = pneg %p155
        $region58: #{tpu_custom_call.1} parent=55 // pred_check_branch
          %793 = sbr.rel (%p791) target = $region60
        $region59: #{tpu_custom_call.1} parent=55 // pred_region
          %s794 = sand.u32 %s140, 1
          %s795 = scalar_lea.sflag [#allocation4], %s794
          %s796 = sand.u32 %s140, 1
          %s797 = smul.addr %s796, 8
          %s798 = scalar_lea.vmem [#allocation7], %s797
          %799 = dma.done %s795, 128
        $region60: #{tpu_custom_call.1} parent=55 // pred_fallthru
          _
      $region56: #{tpu_custom_call.1} parent=5 // pred_fallthru
        _
    $region6: #{tpu_custom_call.1} parent=1 // loop_footer
      %s20 = sadd.s32 1, %s16
    $region7: #{tpu_custom_call.1} parent=1 // loop_footer_branch
      %15 = sbr.rel target = $region3
    $region8: #{tpu_custom_call.1} parent=1 // loop_exit
      _
    %800 = vsyncpa [#allocation3], 1
    %s801 = scalar_lea.sflag [#allocation3], 1
    %802 = vsyncpa %s801, 1
    %803 = vsyncpa [#allocation6], 1
    %804 = vsyncpa [#allocation4], 1
    %s805 = scalar_lea.sflag [#allocation4], 1
    %806 = vsyncpa %s805, 1

</llo_original>
